<compile_context>
chip_gen: v5e
topology: v5e:2x2
jax: 0.10.0
libtpu: 0.0.40
codegen_flags: <defaults>
</compile_context>

<pallas_src>
import jax
import jax.numpy as jnp
from jax.experimental import pallas as pl
from jax.experimental.pallas import tpu as pltpu


def critic_kernel(x_ref, w1_ref, b1_ref, w2_ref, b2_ref, o_ref):
    # l1: Linear(H -> H//2) + ReLU  (real matmul -> MXU)
    h = jnp.dot(x_ref[...], w1_ref[...], preferred_element_type=jnp.float32)
    h = jnp.maximum(h + b1_ref[...], 0.0)          # (TB, Hh) + (1, Hh) broadcast
    # l2: Linear(H//2 -> 1) + tanh. Output width 1 -> do it on the VPU/XLU
    # (elementwise mul + lane reduce) instead of a degenerate N=1 MXU matmul.
    y = jnp.sum(h * w2_ref[...], axis=-1, keepdims=True) + b2_ref[0]
    o_ref[...] = jnp.tanh(y).astype(o_ref.dtype)


def _choose_batch_tile(B, H, itemsize, vmem_budget_bytes=40 * 1024 * 1024):
    """Pick a batch tile TB (multiple of 8) that keeps double-buffered x plus
    resident weights well under the budget (sized for v7x's 64 MiB VMEM/TC)."""
    Hh = max(H // 2, 1)
    resident = H * Hh * itemsize + 2 * Hh * itemsize        # w1 + b1 + w2 row
    avail = max(vmem_budget_bytes - resident, 4 * 1024 * 1024)
    # Per batch row: double-buffered x tile + double-buffered (lane-padded) output.
    per_row = 2 * H * itemsize + 2 * 128 * 4
    tb = int(avail // per_row)
    tb = max(8, min(tb, 2048))
    tb -= tb % 8
    if B <= tb:
        return B
    return tb


def critic_net_forward(hidden_state, w1, b1, w2, b2):
    """hidden_state: (B, H); w1: (H, H//2); b1: (H//2,); w2: (H//2, 1); b2: (1,)."""
    B, H = hidden_state.shape
    Hh = H // 2
    itemsize = hidden_state.dtype.itemsize

    b1_2d = b1.reshape(1, Hh)
    w2_row = w2.reshape(1, Hh)          # (Hh, 1) -> (1, Hh) row for the VPU reduce
    b2_1d = b2.reshape(1)               # single scalar, lives in SMEM

    TB = _choose_batch_tile(B, H, itemsize)
    grid = (pl.cdiv(B, TB),)

    # Explicit VMEM limit: 2x the double-buffered working set, clamped to stay
    # safe on v7x (64 MiB physical) while still above the default scoped limit.
    needed = (2 * TB * H + 2 * TB * 128) * itemsize + H * Hh * 4 + 2 * Hh * 4
    vmem_limit = int(min(max(2 * needed, 32 * 1024 * 1024), 56 * 1024 * 1024))

    out = pl.pallas_call(
        critic_kernel,
        out_shape=jax.ShapeDtypeStruct((B, 1), hidden_state.dtype),
        grid_spec=pl.GridSpec(
            grid=grid,
            in_specs=[
                pl.BlockSpec((TB, H), lambda i: (i, 0)),      # x: batch-tiled
                pl.BlockSpec((H, Hh), lambda i: (0, 0)),      # w1: resident
                pl.BlockSpec((1, Hh), lambda i: (0, 0)),      # b1: resident
                pl.BlockSpec((1, Hh), lambda i: (0, 0)),      # w2 row: resident
                pl.BlockSpec(memory_space=pltpu.MemorySpace.SMEM),  # b2 scalar
            ],
            out_specs=pl.BlockSpec((TB, 1), lambda i: (i, 0)),
        ),
        compiler_params=pltpu.CompilerParams(
            dimension_semantics=("parallel",),   # batch tiles independent -> both TCs on v7x
            vmem_limit_bytes=vmem_limit,
        ),
    )(hidden_state, w1, b1_2d, w2_row, b2_1d)
    return out


def init_params(key, hidden_size, dtype=jnp.float32):
    """Deterministic init matching PyTorch Linear's U(-1/sqrt(fan_in), 1/sqrt(fan_in))."""
    k1, k2, k3, k4 = jax.random.split(key, 4)
    h2 = hidden_size // 2
    bound1 = 1.0 / (hidden_size ** 0.5)
    bound2 = 1.0 / (h2 ** 0.5)
    # Stored as (in, out): w1 == W1_pt.T, w2 == W2_pt.T
    w1 = jax.random.uniform(k1, (hidden_size, h2), dtype, -bound1, bound1)
    b1 = jax.random.uniform(k2, (h2,), dtype, -bound1, bound1)
    w2 = jax.random.uniform(k3, (h2, 1), dtype, -bound2, bound2)
    b2 = jax.random.uniform(k4, (1,), dtype, -bound2, bound2)
    return w1, b1, w2, b2


if __name__ == "__main__":
    key = jax.random.PRNGKey(0)
    k_x, k_p = jax.random.split(key)

    batch = 2
    hidden_size = 32

    hidden_state = jax.random.normal(k_x, (batch, hidden_size), jnp.float32)
    w1, b1, w2, b2 = init_params(k_p, hidden_size)

    out = critic_net_forward(hidden_state, w1, b1, w2, b2)
    out = jax.block_until_ready(out)

    # Reference check in plain JAX (same math as the PyTorch forward).
    ref = jnp.tanh(jnp.maximum(hidden_state @ w1 + b1, 0.0) @ w2 + b2)
    assert out.shape == (batch, 1)
    assert jnp.allclose(out, ref, atol=1e-5, rtol=1e-5)

    print("KERNEL_OK")
</pallas_src>

<mosaic_0001>
module attributes {stable_mosaic.version = 11 : i64} {
  func.func @critic_kernel(%arg0: i32, %arg1: memref<2x32xf32, #tpu.memory_space<vmem>>, %arg2: memref<32x16xf32, #tpu.memory_space<vmem>>, %arg3: memref<1x16xf32, #tpu.memory_space<vmem>>, %arg4: memref<1x16xf32, #tpu.memory_space<vmem>>, %arg5: memref<1xf32, #tpu.memory_space<smem>>, %arg6: memref<2x1xf32, #tpu.memory_space<vmem>>) attributes {dimension_semantics = [#tpu.dimension_semantics<parallel>], iteration_bounds = array<i64: 1>, scalar_prefetch = 0 : i64, scratch_operands = 0 : i64, tpu.core_type = #tpu.core_type<tc>, window_params = [{transform_indices = @transform_0, window_bounds = array<i64: 2, 32>}, {pipeline_mode = #tpu.pipeline_mode<synchronous>, transform_indices = @transform_1, window_bounds = array<i64: 32, 16>}, {pipeline_mode = #tpu.pipeline_mode<synchronous>, transform_indices = @transform_2, window_bounds = array<i64: 1, 16>}, {pipeline_mode = #tpu.pipeline_mode<synchronous>, transform_indices = @transform_3, window_bounds = array<i64: 1, 16>}, {transform_indices = @transform_4, window_bounds = array<i64: 1>}, {transform_indices = @transform_5, window_bounds = array<i64: 2, 1>}]} {
    %c0 = arith.constant 0 : index
    %c0_0 = arith.constant 0 : index
    %0 = vector.load %arg1[%c0, %c0_0] : memref<2x32xf32, #tpu.memory_space<vmem>>, vector<2x32xf32>
    %c0_1 = arith.constant 0 : index
    %c0_2 = arith.constant 0 : index
    %1 = vector.load %arg2[%c0_1, %c0_2] : memref<32x16xf32, #tpu.memory_space<vmem>>, vector<32x16xf32>
    %cst = arith.constant dense<0.000000e+00> : vector<2x16xf32>
    %2 = tpu.matmul %0, %1, %cst {dimension_numbers = #tpu.dot_dimension_numbers<[1], [0], [0], [1], [0, 0, 1, 1], [], []>} : vector<2x32xf32>, vector<32x16xf32>, vector<2x16xf32> -> vector<2x16xf32>
    %c0_3 = arith.constant 0 : index
    %c0_4 = arith.constant 0 : index
    %3 = vector.load %arg3[%c0_3, %c0_4] : memref<1x16xf32, #tpu.memory_space<vmem>>, vector<1x16xf32>
    %4 = vector.broadcast %3 : vector<1x16xf32> to vector<2x16xf32>
    %5 = arith.addf %2, %4 : vector<2x16xf32>
    %cst_5 = arith.constant 0.000000e+00 : f32
    %6 = vector.broadcast %cst_5 : f32 to vector<2x16xf32>
    %7 = arith.maximumf %5, %6 : vector<2x16xf32>
    %c0_6 = arith.constant 0 : index
    %c0_7 = arith.constant 0 : index
    %8 = vector.load %arg4[%c0_6, %c0_7] : memref<1x16xf32, #tpu.memory_space<vmem>>, vector<1x16xf32>
    %9 = vector.broadcast %8 : vector<1x16xf32> to vector<2x16xf32>
    %10 = arith.mulf %7, %9 : vector<2x16xf32>
    %cst_8 = arith.constant dense<0.000000e+00> : vector<2xf32>
    %11 = vector.multi_reduction <add>, %10, %cst_8 [1] : vector<2x16xf32> to vector<2xf32>
    %12 = vector.shape_cast %11 : vector<2xf32> to vector<2x1xf32>
    %c0_9 = arith.constant 0 : index
    %13 = memref.load %arg5[%c0_9] : memref<1xf32, #tpu.memory_space<smem>>
    %14 = vector.broadcast %13 : f32 to vector<2x1xf32>
    %15 = arith.addf %12, %14 : vector<2x1xf32>
    %16 = math.tanh %15 : vector<2x1xf32>
    %c0_10 = arith.constant 0 : index
    %c0_11 = arith.constant 0 : index
    %17 = vector.load %arg6[%c0_10, %c0_11] : memref<2x1xf32, #tpu.memory_space<vmem>>, vector<2x1xf32>
    tpu.vector_store %arg6[%c0_10, %c0_11], %16 {strides = array<i32>} : memref<2x1xf32, #tpu.memory_space<vmem>>, vector<2x1xf32>,
    return
  }
  func.func @transform_0(%arg0: i32) -> (i32, i32) {
    %c0_i32 = arith.constant 0 : i32
    %c0_i32_0 = arith.constant 0 : i32
    return %arg0, %c0_i32 : i32, i32
  }
  func.func @transform_1(%arg0: i32) -> (i32, i32) {
    %c0_i32 = arith.constant 0 : i32
    %c0_i32_0 = arith.constant 0 : i32
    %c0_i32_1 = arith.constant 0 : i32
    return %c0_i32, %c0_i32_0 : i32, i32
  }
  func.func @transform_2(%arg0: i32) -> (i32, i32) {
    %c0_i32 = arith.constant 0 : i32
    %c0_i32_0 = arith.constant 0 : i32
    %c0_i32_1 = arith.constant 0 : i32
    return %c0_i32, %c0_i32_0 : i32, i32
  }
  func.func @transform_3(%arg0: i32) -> (i32, i32) {
    %c0_i32 = arith.constant 0 : i32
    %c0_i32_0 = arith.constant 0 : i32
    %c0_i32_1 = arith.constant 0 : i32
    return %c0_i32, %c0_i32_0 : i32, i32
  }
  func.func @transform_4(%arg0: i32) -> i32 {
    %c0_i32 = arith.constant 0 : i32
    %c0_i32_0 = arith.constant 0 : i32
    return %c0_i32 : i32
  }
  func.func @transform_5(%arg0: i32) -> (i32, i32) {
    %c0_i32 = arith.constant 0 : i32
    %c0_i32_0 = arith.constant 0 : i32
    return %arg0, %c0_i32 : i32, i32
  }
}

</mosaic_0001>

<llo_original>
// kernel: tpu_custom_call.1
$region0: #{tpu_custom_call.1}
  #allocation0 [shape = 'u32[]', space=smem, size = 0x4, offset = 0x4, fixed_abs, tag = 'smem constant byte address 0x4 - core index']
  #allocation1 [shape = 'u32[72,128]{1,0:T(1,128)}', space=vmem, size = 0x9000, scoped, tag = 'internal scratch']
  #allocation2 [shape = 'f32[1]{0:T(128)S(6)}', space=smem, size = 0x200, scoped, tag = 'scoped memory for tpu_custom_call.1']
  %s0 = inlined_call_operand.vmem [shape: f32[2,32], index: 0, kind: input, shape index: {}]
  %s1 = inlined_call_operand.vmem [shape: f32[32,16], index: 1, kind: input, shape index: {}]
  %s2 = inlined_call_operand.vmem [shape: f32[1,16], index: 2, kind: input, shape index: {}]
  %s3 = inlined_call_operand.vmem [shape: f32[1,16], index: 3, kind: input, shape index: {}]
  %s4 = inlined_call_operand.<no memory space> [shape: f32[1], index: 4, kind: input, shape index: {}]
  %s5 = inlined_call_operand.vmem [shape: f32[2,1], index: 5, kind: output, shape index: {}]
  %s6 = sld [smem:[#allocation0]]
  $region30: #{tpu_custom_call.1} parent=0
    _
  %s8 = ssub.s32 1, %s6
  %s9 = scalar_select 0, %s8, %s6
  %10 = sst [smem:[#allocation2]] %s4
  // Predicated region
  $region2: #{tpu_custom_call.1} parent=0 // pred_check
    _
  $region3: #{tpu_custom_call.1} parent=0 // pred_check_branch
    %12 = sbr.rel (0) target = $region5
  $region4: #{tpu_custom_call.1} parent=0 // pred_region
    _
  $region5: #{tpu_custom_call.1} parent=0 // pred_fallthru
    _
  // Predicated region
  $region6: #{tpu_custom_call.1} parent=0 // pred_check
    _
  $region7: #{tpu_custom_call.1} parent=0 // pred_check_branch
    %14 = sbr.rel (0) target = $region9
  $region8: #{tpu_custom_call.1} parent=0 // pred_region
    _
  $region9: #{tpu_custom_call.1} parent=0 // pred_fallthru
    _
  // Predicated region
  $region10: #{tpu_custom_call.1} parent=0 // pred_check
    _
  $region11: #{tpu_custom_call.1} parent=0 // pred_check_branch
    %16 = sbr.rel (0) target = $region13
  $region12: #{tpu_custom_call.1} parent=0 // pred_region
    _
  $region13: #{tpu_custom_call.1} parent=0 // pred_fallthru
    _
  // Predicated region
  $region14: #{tpu_custom_call.1} parent=0 // pred_check
    _
  $region15: #{tpu_custom_call.1} parent=0 // pred_check_branch
    %18 = sbr.rel (0) target = $region17
  $region16: #{tpu_custom_call.1} parent=0 // pred_region
    _
  $region17: #{tpu_custom_call.1} parent=0 // pred_fallthru
    _
  // Predicated region
  $region18: #{tpu_custom_call.1} parent=0 // pred_check
    _
  $region19: #{tpu_custom_call.1} parent=0 // pred_check_branch
    %20 = sbr.rel (0) target = $region21
  $region20: #{tpu_custom_call.1} parent=0 // pred_region
    _
  $region21: #{tpu_custom_call.1} parent=0 // pred_fallthru
    _
  %v21 = vld [vmem:[%s0] sm:$0x3]
  %v22 = vld [vmem:[%s1] sm:$0xff]
  %v23 = vld [vmem:[%s1 + $0x8] sm:$0xff]
  %v24 = vld [vmem:[%s1 + $0x10] sm:$0xff]
  %v25 = vld [vmem:[%s1 + $0x18] sm:$0xff]
  %v26 = vld [vmem:[%s2] sm:$0x1]
  %v28 = vperm.slane %v26, 0
  %vm30 = vcmask 261120
  %v32 = vsel %vm30, %v21, 0
  %34 = vmatpush.msra.mxu0 0.0
  %35 = vmatpush.msra.mxu0 0.0
  %36 = vmatpush.msra.mxu0 0.0
  %37 = vmatpush.msra.mxu0 0.0
  %38 = vmatpush.msra.mxu0 0.0
  %39 = vmatpush.msra.mxu0 0.0
  %40 = vmatpush.msra.mxu0 0.0
  %41 = vmatpush.msra.mxu0 0.0
  %42 = vmatpush.msra.mxu0 0.0
  %43 = vmatpush.msra.mxu0 0.0
  %44 = vmatpush.msra.mxu0 0.0
  %45 = vmatpush.msra.mxu0 0.0
  %46 = vmatpush.msra.mxu0 %v25
  %47 = vmatpush.msra.mxu0 %v24
  %48 = vmatpush.msra.mxu0 %v23
  %49 = vmatpush.msra.mxu0 %v22
  %50 = vmatmul.f32.gmra.mxu0 %v32
  %v51 = vpop.f32.mrf.mxu0
  %v52 = vadd.f32 %v28, %v51
  %53 = vdwg.mxu0
  %v54 = vmax.f32 %v52, 0.0
  %v55 = vld [vmem:[%s3] sm:$0x1]
  %v57 = vperm.slane %v55, 0
  %v59 = vmul.f32 %v54, %v57
  %vm60 = vcmask 123904
  %v61 = vsel %vm60, %v59, 0.0
  %62 = vadd.xlane.f32.xlu0 %v61
  %v63 = vpop.xlane.xlu0 %62
  %s64 = sld [smem:[#allocation2]]
  %v65 = vstv %s64
  %v66 = vadd.f32 %v63, %v65
  %v67 = vtanh.pop %v66
  %vm68 = vcmask 1024
  %69 = vst.msk [vmem:[%s5] sm:$0x3] %vm68, %v67
  // Predicated region
  $region22: #{tpu_custom_call.1} parent=0 // pred_check
    _
  $region23: #{tpu_custom_call.1} parent=0 // pred_check_branch
    %71 = sbr.rel (0) target = $region25
  $region24: #{tpu_custom_call.1} parent=0 // pred_region
    _
  $region25: #{tpu_custom_call.1} parent=0 // pred_fallthru
    _
  // Predicated region
  $region26: #{tpu_custom_call.1} parent=0 // pred_check
    _
  $region27: #{tpu_custom_call.1} parent=0 // pred_check_branch
    %73 = sbr.rel (0) target = $region29
  $region28: #{tpu_custom_call.1} parent=0 // pred_region
    _
  $region29: #{tpu_custom_call.1} parent=0 // pred_fallthru
    _

</llo_original>
